<compile_context>
chip_gen: v6e
topology: v6e:2x2x1
jax: 0.10.0
libtpu: 0.0.40
codegen_flags: <defaults>
</compile_context>

<pallas_src>
import functools
import math

import jax
import jax.numpy as jnp
import numpy as np
from jax import lax
from jax.experimental import pallas as pl
from jax.experimental.pallas import tpu as pltpu


# ----------------------------- Pallas kernel -------------------------------

def mhca_kernel(xe_ref, xd_ref, wq_ref, wkv_ref, wp_ref, bp_ref, o_ref, acc_ref,
                *, batch, t_enc, t_dec, num_heads, head_size):
    """Whole-batch multi-head cross-attention (single grid step).

    xe_ref : (B*T_enc, H)      encoder activations (source of K, V), batch folded into M
    xd_ref : (B*T_dec, H)      decoder activations (source of Q)
    wq_ref : (H, nh*hs)        fused query weights, 1/sqrt(hs) pre-folded
    wkv_ref: (H, 2*nh*hs)      fused key|value weights ([K heads | V heads])
    wp_ref : (nh*hs, Hp)       output projection W.T, zero-padded to Hp (lane-dense)
    bp_ref : (1, Hp)           output projection bias, zero-padded to Hp
    o_ref  : (B*T_dec, Hp)     lane-dense output slab
    acc_ref: (B*T_dec, nh*hs)  VMEM scratch: concatenated head outputs
    """
    B, Te, Td, nh, hs = batch, t_enc, t_dec, num_heads, head_size

    xe = xe_ref[...]                                   # (B*Te, H)
    xd = xd_ref[...]                                   # (B*Td, H)

    # All query heads for all batch rows in ONE lane-dense matmul (scale folded
    # into wq wrapper-side); all key+value heads in ONE matmul.
    q = jnp.dot(xd, wq_ref[...], preferred_element_type=jnp.float32)    # (B*Td, nh*hs)
    kv = jnp.dot(xe, wkv_ref[...], preferred_element_type=jnp.float32)  # (B*Te, 2*nh*hs)

    for b in range(B):                                 # static unroll: tiny B, nh
        q_b = q[b * Td:(b + 1) * Td, :]                # (Td, nh*hs)   static slices
        k_b = kv[b * Te:(b + 1) * Te, :nh * hs]        # (Te, nh*hs)
        v_b = kv[b * Te:(b + 1) * Te, nh * hs:]        # (Te, nh*hs)
        for h in range(nh):
            qh = q_b[:, h * hs:(h + 1) * hs]           # (Td, hs)
            kh = k_b[:, h * hs:(h + 1) * hs]           # (Te, hs)
            vh = v_b[:, h * hs:(h + 1) * hs]           # (Te, hs)

            # q @ k^T without materializing a transpose: contract dim 1 of both.
            s = lax.dot_general(qh, kh, (((1,), (1,)), ((), ())),
                                preferred_element_type=jnp.float32)     # (Td, Te)

            # softmax along keys -- exact normalization for parity with PyTorch
            m = jnp.max(s, axis=-1, keepdims=True)
            e = jnp.exp(s - m)
            wei = e / jnp.sum(e, axis=-1, keepdims=True)

            # attention dropout p=0.0 -> identity
            acc_ref[b * Td:(b + 1) * Td, h * hs:(h + 1) * hs] = jnp.dot(
                wei, vh, preferred_element_type=jnp.float32)            # (Td, hs)

    # ONE projection matmul over the concatenated-head slab + bias.
    out = jnp.dot(acc_ref[...], wp_ref[...],
                  preferred_element_type=jnp.float32) + bp_ref[...]     # (B*Td, Hp)
    # output dropout p=0.0 -> identity; store is lane-dense (Hp multiple of 128)
    o_ref[...] = out.astype(o_ref.dtype)


# ----------------------------- weight packing (once, at init) ----------------

def pack_params(params, *, num_heads, head_size):
    """Pack PyTorch-layout weights ONCE (not per forward call).

    per-head W (hs, H) -> W.T (H, hs), heads concatenated column-wise;
    attention scale folded into Wq; proj weights/bias zero-padded to Hp=⌈H/128⌉*128.
    """
    nh, hs = num_heads, head_size
    H = params["wq"].shape[-1]
    Hp = ((H + 127) // 128) * 128
    scale = 1.0 / math.sqrt(hs)

    wq_p = (jnp.transpose(params["wq"], (2, 0, 1)).reshape(H, nh * hs)
            * scale).astype(jnp.float32)                                # (H, nh*hs)
    wk_p = jnp.transpose(params["wk"], (2, 0, 1)).reshape(H, nh * hs)
    wv_p = jnp.transpose(params["wv"], (2, 0, 1)).reshape(H, nh * hs)
    wkv_p = jnp.concatenate([wk_p, wv_p], axis=1).astype(jnp.float32)   # (H, 2*nh*hs)

    wp_p = jnp.zeros((nh * hs, Hp), jnp.float32).at[:, :H].set(params["wp"].T)
    bp_p = jnp.zeros((1, Hp), jnp.float32).at[:, :H].set(params["bp"][None, :])
    return {"wq": wq_p, "wkv": wkv_p, "wp": wp_p, "bp": bp_p}


# ----------------------------- wrapper --------------------------------------

def multi_head_cross_attention(x_encode, x_decode, packed, *, num_heads, head_size):
    """x_encode: (B, T_enc, H), x_decode: (B, T_dec, H) -> (B, T_dec, H)."""
    B, Te, H = x_encode.shape
    _, Td, _ = x_decode.shape
    nh, hs = num_heads, head_size
    Hp = packed["wp"].shape[1]

    # Fold batch into the matmul M dimension (contiguous reshape, no copy).
    xe2 = x_encode.reshape(B * Te, H)
    xd2 = x_decode.reshape(B * Td, H)

    kernel = functools.partial(mhca_kernel, batch=B, t_enc=Te, t_dec=Td,
                               num_heads=nh, head_size=hs)

    out_flat = pl.pallas_call(
        kernel,
        out_shape=jax.ShapeDtypeStruct((B * Td, Hp), x_decode.dtype),
        grid=(1,),
        in_specs=[
            pl.BlockSpec((B * Te, H), lambda i: (0, 0)),
            pl.BlockSpec((B * Td, H), lambda i: (0, 0)),
            pl.BlockSpec((H, nh * hs), lambda i: (0, 0)),
            pl.BlockSpec((H, 2 * nh * hs), lambda i: (0, 0)),
            pl.BlockSpec((nh * hs, Hp), lambda i: (0, 0)),
            pl.BlockSpec((1, Hp), lambda i: (0, 0)),
        ],
        out_specs=pl.BlockSpec((B * Td, Hp), lambda i: (0, 0)),
        scratch_shapes=[pltpu.VMEM((B * Td, nh * hs), jnp.float32)],
        compiler_params=pltpu.CompilerParams(dimension_semantics=("arbitrary",)),
    )(xe2, xd2, packed["wq"], packed["wkv"], packed["wp"], packed["bp"])

    # slice off the lane padding, restore (B, T_dec, H)
    return out_flat[:, :H].reshape(B, Td, H)


# ----------------------------- parameter init -------------------------------

def init_params(key, n_embd, num_heads, head_size):
    """PyTorch-layout weights: per-head Linear(n_embd -> head_size, bias=False)
    stored as (num_heads, head_size, n_embd); proj Linear(nh*hs -> n_embd)."""
    ks = jax.random.split(key, 5)
    s_in = n_embd ** -0.5
    s_pr = (num_heads * head_size) ** -0.5
    return {
        "wq": (s_in * jax.random.normal(ks[0], (num_heads, head_size, n_embd))).astype(jnp.float32),
        "wk": (s_in * jax.random.normal(ks[1], (num_heads, head_size, n_embd))).astype(jnp.float32),
        "wv": (s_in * jax.random.normal(ks[2], (num_heads, head_size, n_embd))).astype(jnp.float32),
        "wp": (s_pr * jax.random.normal(ks[3], (n_embd, num_heads * head_size))).astype(jnp.float32),
        "bp": (s_pr * jax.random.normal(ks[4], (n_embd,))).astype(jnp.float32),
    }


# ----------------------------- pure-JAX reference ---------------------------

def ref_mhca(x_encode, x_decode, params):
    nh, hs, H = params["wq"].shape
    outs = []
    for h in range(nh):
        k = x_encode @ params["wk"][h].T
        q = x_decode @ params["wq"][h].T
        v = x_encode @ params["wv"][h].T
        wei = jax.nn.softmax((q @ jnp.swapaxes(k, -1, -2)) * (hs ** -0.5), axis=-1)
        outs.append(wei @ v)
    out = jnp.concatenate(outs, axis=-1) @ params["wp"].T + params["bp"]
    return out


# ----------------------------- main ------------------------------------------

if __name__ == "__main__":
    # small shapes consistent with the module
    B = 2
    T_enc = 16
    T_dec = 8
    n_embd = 32
    num_heads = 2
    head_size = 16

    key = jax.random.PRNGKey(0)
    kp, ke, kd = jax.random.split(key, 3)
    params = init_params(kp, n_embd, num_heads, head_size)
    packed = pack_params(params, num_heads=num_heads, head_size=head_size)  # once, at init

    x_encode = jax.random.normal(ke, (B, T_enc, n_embd), dtype=jnp.float32)
    x_decode = jax.random.normal(kd, (B, T_dec, n_embd), dtype=jnp.float32)

    out = multi_head_cross_attention(x_encode, x_decode, packed,
                                     num_heads=num_heads, head_size=head_size)
    out = jax.block_until_ready(out)

    ref = jax.block_until_ready(ref_mhca(x_encode, x_decode, params))
    assert out.shape == (B, T_dec, n_embd)
    np.testing.assert_allclose(np.asarray(out), np.asarray(ref), atol=1e-3, rtol=1e-3)

    print("KERNEL_OK")
</pallas_src>

<mosaic_0001>
module attributes {stable_mosaic.version = 11 : i64} {
  func.func @mhca_kernel(%arg0: i32, %arg1: memref<32x32xf32, #tpu.memory_space<vmem>>, %arg2: memref<16x32xf32, #tpu.memory_space<vmem>>, %arg3: memref<32x32xf32, #tpu.memory_space<vmem>>, %arg4: memref<32x64xf32, #tpu.memory_space<vmem>>, %arg5: memref<32x128xf32, #tpu.memory_space<vmem>>, %arg6: memref<1x128xf32, #tpu.memory_space<vmem>>, %arg7: memref<16x128xf32, #tpu.memory_space<vmem>>, %arg8: memref<16x32xf32, #tpu.memory_space<vmem>>) attributes {dimension_semantics = [#tpu.dimension_semantics<arbitrary>], iteration_bounds = array<i64: 1>, scalar_prefetch = 0 : i64, scratch_operands = 1 : i64, tpu.core_type = #tpu.core_type<tc>, window_params = [{pipeline_mode = #tpu.pipeline_mode<synchronous>, transform_indices = @transform_0, window_bounds = array<i64: 32, 32>}, {pipeline_mode = #tpu.pipeline_mode<synchronous>, transform_indices = @transform_1, window_bounds = array<i64: 16, 32>}, {pipeline_mode = #tpu.pipeline_mode<synchronous>, transform_indices = @transform_2, window_bounds = array<i64: 32, 32>}, {pipeline_mode = #tpu.pipeline_mode<synchronous>, transform_indices = @transform_3, window_bounds = array<i64: 32, 64>}, {pipeline_mode = #tpu.pipeline_mode<synchronous>, transform_indices = @transform_4, window_bounds = array<i64: 32, 128>}, {pipeline_mode = #tpu.pipeline_mode<synchronous>, transform_indices = @transform_5, window_bounds = array<i64: 1, 128>}, {pipeline_mode = #tpu.pipeline_mode<synchronous>, transform_indices = @transform_6, window_bounds = array<i64: 16, 128>}]} {
    %c0 = arith.constant 0 : index
    %c0_0 = arith.constant 0 : index
    %0 = vector.load %arg1[%c0, %c0_0] : memref<32x32xf32, #tpu.memory_space<vmem>>, vector<32x32xf32>
    %c0_1 = arith.constant 0 : index
    %c0_2 = arith.constant 0 : index
    %1 = vector.load %arg2[%c0_1, %c0_2] : memref<16x32xf32, #tpu.memory_space<vmem>>, vector<16x32xf32>
    %c0_3 = arith.constant 0 : index
    %c0_4 = arith.constant 0 : index
    %2 = vector.load %arg3[%c0_3, %c0_4] : memref<32x32xf32, #tpu.memory_space<vmem>>, vector<32x32xf32>
    %cst = arith.constant dense<0.000000e+00> : vector<16x32xf32>
    %3 = tpu.matmul %1, %2, %cst {dimension_numbers = #tpu.dot_dimension_numbers<[1], [0], [0], [1], [0, 0, 1, 1], [], []>} : vector<16x32xf32>, vector<32x32xf32>, vector<16x32xf32> -> vector<16x32xf32>
    %c0_5 = arith.constant 0 : index
    %c0_6 = arith.constant 0 : index
    %4 = vector.load %arg4[%c0_5, %c0_6] : memref<32x64xf32, #tpu.memory_space<vmem>>, vector<32x64xf32>
    %cst_7 = arith.constant dense<0.000000e+00> : vector<32x64xf32>
    %5 = tpu.matmul %0, %4, %cst_7 {dimension_numbers = #tpu.dot_dimension_numbers<[1], [0], [0], [1], [0, 0, 1, 1], [], []>} : vector<32x32xf32>, vector<32x64xf32>, vector<32x64xf32> -> vector<32x64xf32>
    %6 = vector.extract_strided_slice %3 {offsets = [0, 0], sizes = [8, 32], strides = [1, 1]} : vector<16x32xf32> to vector<8x32xf32>
    %7 = vector.extract_strided_slice %5 {offsets = [0, 0], sizes = [16, 32], strides = [1, 1]} : vector<32x64xf32> to vector<16x32xf32>
    %8 = vector.extract_strided_slice %5 {offsets = [0, 32], sizes = [16, 32], strides = [1, 1]} : vector<32x64xf32> to vector<16x32xf32>
    %9 = vector.extract_strided_slice %6 {offsets = [0, 0], sizes = [8, 16], strides = [1, 1]} : vector<8x32xf32> to vector<8x16xf32>
    %10 = vector.extract_strided_slice %7 {offsets = [0, 0], sizes = [16, 16], strides = [1, 1]} : vector<16x32xf32> to vector<16x16xf32>
    %11 = vector.extract_strided_slice %8 {offsets = [0, 0], sizes = [16, 16], strides = [1, 1]} : vector<16x32xf32> to vector<16x16xf32>
    %cst_8 = arith.constant dense<0.000000e+00> : vector<8x16xf32>
    %12 = tpu.matmul %9, %10, %cst_8 {dimension_numbers = #tpu.dot_dimension_numbers<[1], [1], [0], [0], [0, 0, 1, 0], [], []>} : vector<8x16xf32>, vector<16x16xf32>, vector<8x16xf32> -> vector<8x16xf32>
    %cst_9 = arith.constant dense<0xFF800000> : vector<8xf32>
    %13 = vector.multi_reduction <maximumf>, %12, %cst_9 [1] : vector<8x16xf32> to vector<8xf32>
    %14 = vector.shape_cast %13 : vector<8xf32> to vector<8x1xf32>
    %15 = vector.broadcast %14 : vector<8x1xf32> to vector<8x16xf32>
    %16 = arith.subf %12, %15 : vector<8x16xf32>
    %17 = math.exp %16 : vector<8x16xf32>
    %cst_10 = arith.constant dense<0.000000e+00> : vector<8xf32>
    %18 = vector.multi_reduction <add>, %17, %cst_10 [1] : vector<8x16xf32> to vector<8xf32>
    %19 = vector.shape_cast %18 : vector<8xf32> to vector<8x1xf32>
    %20 = vector.broadcast %19 : vector<8x1xf32> to vector<8x16xf32>
    %21 = arith.divf %17, %20 : vector<8x16xf32>
    %cst_11 = arith.constant dense<0.000000e+00> : vector<8x16xf32>
    %22 = tpu.matmul %21, %11, %cst_11 {dimension_numbers = #tpu.dot_dimension_numbers<[1], [0], [0], [1], [0, 0, 1, 1], [], []>} : vector<8x16xf32>, vector<16x16xf32>, vector<8x16xf32> -> vector<8x16xf32>
    %c0_12 = arith.constant 0 : index
    %c0_13 = arith.constant 0 : index
    %23 = vector.load %arg8[%c0_12, %c0_13] : memref<16x32xf32, #tpu.memory_space<vmem>>, vector<8x16xf32>
    tpu.vector_store %arg8[%c0_12, %c0_13], %22 {strides = array<i32>} : memref<16x32xf32, #tpu.memory_space<vmem>>, vector<8x16xf32>,
    %24 = vector.extract_strided_slice %6 {offsets = [0, 16], sizes = [8, 16], strides = [1, 1]} : vector<8x32xf32> to vector<8x16xf32>
    %25 = vector.extract_strided_slice %7 {offsets = [0, 16], sizes = [16, 16], strides = [1, 1]} : vector<16x32xf32> to vector<16x16xf32>
    %26 = vector.extract_strided_slice %8 {offsets = [0, 16], sizes = [16, 16], strides = [1, 1]} : vector<16x32xf32> to vector<16x16xf32>
    %cst_14 = arith.constant dense<0.000000e+00> : vector<8x16xf32>
    %27 = tpu.matmul %24, %25, %cst_14 {dimension_numbers = #tpu.dot_dimension_numbers<[1], [1], [0], [0], [0, 0, 1, 0], [], []>} : vector<8x16xf32>, vector<16x16xf32>, vector<8x16xf32> -> vector<8x16xf32>
    %cst_15 = arith.constant dense<0xFF800000> : vector<8xf32>
    %28 = vector.multi_reduction <maximumf>, %27, %cst_15 [1] : vector<8x16xf32> to vector<8xf32>
    %29 = vector.shape_cast %28 : vector<8xf32> to vector<8x1xf32>
    %30 = vector.broadcast %29 : vector<8x1xf32> to vector<8x16xf32>
    %31 = arith.subf %27, %30 : vector<8x16xf32>
    %32 = math.exp %31 : vector<8x16xf32>
    %cst_16 = arith.constant dense<0.000000e+00> : vector<8xf32>
    %33 = vector.multi_reduction <add>, %32, %cst_16 [1] : vector<8x16xf32> to vector<8xf32>
    %34 = vector.shape_cast %33 : vector<8xf32> to vector<8x1xf32>
    %35 = vector.broadcast %34 : vector<8x1xf32> to vector<8x16xf32>
    %36 = arith.divf %32, %35 : vector<8x16xf32>
    %cst_17 = arith.constant dense<0.000000e+00> : vector<8x16xf32>
    %37 = tpu.matmul %36, %26, %cst_17 {dimension_numbers = #tpu.dot_dimension_numbers<[1], [0], [0], [1], [0, 0, 1, 1], [], []>} : vector<8x16xf32>, vector<16x16xf32>, vector<8x16xf32> -> vector<8x16xf32>
    %c0_18 = arith.constant 0 : index
    %c16 = arith.constant 16 : index
    %38 = vector.load %arg8[%c0_18, %c16] : memref<16x32xf32, #tpu.memory_space<vmem>>, vector<8x16xf32>
    tpu.vector_store %arg8[%c0_18, %c16], %37 {strides = array<i32>} : memref<16x32xf32, #tpu.memory_space<vmem>>, vector<8x16xf32>,
    %39 = vector.extract_strided_slice %3 {offsets = [8, 0], sizes = [8, 32], strides = [1, 1]} : vector<16x32xf32> to vector<8x32xf32>
    %40 = vector.extract_strided_slice %5 {offsets = [16, 0], sizes = [16, 32], strides = [1, 1]} : vector<32x64xf32> to vector<16x32xf32>
    %41 = vector.extract_strided_slice %5 {offsets = [16, 32], sizes = [16, 32], strides = [1, 1]} : vector<32x64xf32> to vector<16x32xf32>
    %42 = vector.extract_strided_slice %39 {offsets = [0, 0], sizes = [8, 16], strides = [1, 1]} : vector<8x32xf32> to vector<8x16xf32>
    %43 = vector.extract_strided_slice %40 {offsets = [0, 0], sizes = [16, 16], strides = [1, 1]} : vector<16x32xf32> to vector<16x16xf32>
    %44 = vector.extract_strided_slice %41 {offsets = [0, 0], sizes = [16, 16], strides = [1, 1]} : vector<16x32xf32> to vector<16x16xf32>
    %cst_19 = arith.constant dense<0.000000e+00> : vector<8x16xf32>
    %45 = tpu.matmul %42, %43, %cst_19 {dimension_numbers = #tpu.dot_dimension_numbers<[1], [1], [0], [0], [0, 0, 1, 0], [], []>} : vector<8x16xf32>, vector<16x16xf32>, vector<8x16xf32> -> vector<8x16xf32>
    %cst_20 = arith.constant dense<0xFF800000> : vector<8xf32>
    %46 = vector.multi_reduction <maximumf>, %45, %cst_20 [1] : vector<8x16xf32> to vector<8xf32>
    %47 = vector.shape_cast %46 : vector<8xf32> to vector<8x1xf32>
    %48 = vector.broadcast %47 : vector<8x1xf32> to vector<8x16xf32>
    %49 = arith.subf %45, %48 : vector<8x16xf32>
    %50 = math.exp %49 : vector<8x16xf32>
    %cst_21 = arith.constant dense<0.000000e+00> : vector<8xf32>
    %51 = vector.multi_reduction <add>, %50, %cst_21 [1] : vector<8x16xf32> to vector<8xf32>
    %52 = vector.shape_cast %51 : vector<8xf32> to vector<8x1xf32>
    %53 = vector.broadcast %52 : vector<8x1xf32> to vector<8x16xf32>
    %54 = arith.divf %50, %53 : vector<8x16xf32>
    %cst_22 = arith.constant dense<0.000000e+00> : vector<8x16xf32>
    %55 = tpu.matmul %54, %44, %cst_22 {dimension_numbers = #tpu.dot_dimension_numbers<[1], [0], [0], [1], [0, 0, 1, 1], [], []>} : vector<8x16xf32>, vector<16x16xf32>, vector<8x16xf32> -> vector<8x16xf32>
    %c8 = arith.constant 8 : index
    %c0_23 = arith.constant 0 : index
    %56 = vector.load %arg8[%c8, %c0_23] : memref<16x32xf32, #tpu.memory_space<vmem>>, vector<8x16xf32>
    tpu.vector_store %arg8[%c8, %c0_23], %55 {strides = array<i32>} : memref<16x32xf32, #tpu.memory_space<vmem>>, vector<8x16xf32>,
    %57 = vector.extract_strided_slice %39 {offsets = [0, 16], sizes = [8, 16], strides = [1, 1]} : vector<8x32xf32> to vector<8x16xf32>
    %58 = vector.extract_strided_slice %40 {offsets = [0, 16], sizes = [16, 16], strides = [1, 1]} : vector<16x32xf32> to vector<16x16xf32>
    %59 = vector.extract_strided_slice %41 {offsets = [0, 16], sizes = [16, 16], strides = [1, 1]} : vector<16x32xf32> to vector<16x16xf32>
    %cst_24 = arith.constant dense<0.000000e+00> : vector<8x16xf32>
    %60 = tpu.matmul %57, %58, %cst_24 {dimension_numbers = #tpu.dot_dimension_numbers<[1], [1], [0], [0], [0, 0, 1, 0], [], []>} : vector<8x16xf32>, vector<16x16xf32>, vector<8x16xf32> -> vector<8x16xf32>
    %cst_25 = arith.constant dense<0xFF800000> : vector<8xf32>
    %61 = vector.multi_reduction <maximumf>, %60, %cst_25 [1] : vector<8x16xf32> to vector<8xf32>
    %62 = vector.shape_cast %61 : vector<8xf32> to vector<8x1xf32>
    %63 = vector.broadcast %62 : vector<8x1xf32> to vector<8x16xf32>
    %64 = arith.subf %60, %63 : vector<8x16xf32>
    %65 = math.exp %64 : vector<8x16xf32>
    %cst_26 = arith.constant dense<0.000000e+00> : vector<8xf32>
    %66 = vector.multi_reduction <add>, %65, %cst_26 [1] : vector<8x16xf32> to vector<8xf32>
    %67 = vector.shape_cast %66 : vector<8xf32> to vector<8x1xf32>
    %68 = vector.broadcast %67 : vector<8x1xf32> to vector<8x16xf32>
    %69 = arith.divf %65, %68 : vector<8x16xf32>
    %cst_27 = arith.constant dense<0.000000e+00> : vector<8x16xf32>
    %70 = tpu.matmul %69, %59, %cst_27 {dimension_numbers = #tpu.dot_dimension_numbers<[1], [0], [0], [1], [0, 0, 1, 1], [], []>} : vector<8x16xf32>, vector<16x16xf32>, vector<8x16xf32> -> vector<8x16xf32>
    %c8_28 = arith.constant 8 : index
    %c16_29 = arith.constant 16 : index
    %71 = vector.load %arg8[%c8_28, %c16_29] : memref<16x32xf32, #tpu.memory_space<vmem>>, vector<8x16xf32>
    tpu.vector_store %arg8[%c8_28, %c16_29], %70 {strides = array<i32>} : memref<16x32xf32, #tpu.memory_space<vmem>>, vector<8x16xf32>,
    %c0_30 = arith.constant 0 : index
    %c0_31 = arith.constant 0 : index
    %72 = vector.load %arg8[%c0_30, %c0_31] : memref<16x32xf32, #tpu.memory_space<vmem>>, vector<16x32xf32>
    %c0_32 = arith.constant 0 : index
    %c0_33 = arith.constant 0 : index
    %73 = vector.load %arg5[%c0_32, %c0_33] : memref<32x128xf32, #tpu.memory_space<vmem>>, vector<32x128xf32>
    %cst_34 = arith.constant dense<0.000000e+00> : vector<16x128xf32>
    %74 = tpu.matmul %72, %73, %cst_34 {dimension_numbers = #tpu.dot_dimension_numbers<[1], [0], [0], [1], [0, 0, 1, 1], [], []>} : vector<16x32xf32>, vector<32x128xf32>, vector<16x128xf32> -> vector<16x128xf32>
    %c0_35 = arith.constant 0 : index
    %c0_36 = arith.constant 0 : index
    %75 = vector.load %arg6[%c0_35, %c0_36] : memref<1x128xf32, #tpu.memory_space<vmem>>, vector<1x128xf32>
    %76 = vector.broadcast %75 : vector<1x128xf32> to vector<16x128xf32>
    %77 = arith.addf %74, %76 : vector<16x128xf32>
    %c0_37 = arith.constant 0 : index
    %c0_38 = arith.constant 0 : index
    %78 = vector.load %arg7[%c0_37, %c0_38] : memref<16x128xf32, #tpu.memory_space<vmem>>, vector<16x128xf32>
    tpu.vector_store %arg7[%c0_37, %c0_38], %77 {strides = array<i32>} : memref<16x128xf32, #tpu.memory_space<vmem>>, vector<16x128xf32>,
    return
  }
  func.func @transform_0(%arg0: i32) -> (i32, i32) {
    %c0_i32 = arith.constant 0 : i32
    %c0_i32_0 = arith.constant 0 : i32
    %c0_i32_1 = arith.constant 0 : i32
    return %c0_i32, %c0_i32_0 : i32, i32
  }
  func.func @transform_1(%arg0: i32) -> (i32, i32) {
    %c0_i32 = arith.constant 0 : i32
    %c0_i32_0 = arith.constant 0 : i32
    %c0_i32_1 = arith.constant 0 : i32
    return %c0_i32, %c0_i32_0 : i32, i32
  }
  func.func @transform_2(%arg0: i32) -> (i32, i32) {
    %c0_i32 = arith.constant 0 : i32
    %c0_i32_0 = arith.constant 0 : i32
    %c0_i32_1 = arith.constant 0 : i32
    return %c0_i32, %c0_i32_0 : i32, i32
  }
  func.func @transform_3(%arg0: i32) -> (i32, i32) {
    %c0_i32 = arith.constant 0 : i32
    %c0_i32_0 = arith.constant 0 : i32
    %c0_i32_1 = arith.constant 0 : i32
    return %c0_i32, %c0_i32_0 : i32, i32
  }
  func.func @transform_4(%arg0: i32) -> (i32, i32) {
    %c0_i32 = arith.constant 0 : i32
    %c0_i32_0 = arith.constant 0 : i32
    %c0_i32_1 = arith.constant 0 : i32
    return %c0_i32, %c0_i32_0 : i32, i32
  }
  func.func @transform_5(%arg0: i32) -> (i32, i32) {
    %c0_i32 = arith.constant 0 : i32
    %c0_i32_0 = arith.constant 0 : i32
    %c0_i32_1 = arith.constant 0 : i32
    return %c0_i32, %c0_i32_0 : i32, i32
  }
  func.func @transform_6(%arg0: i32) -> (i32, i32) {
    %c0_i32 = arith.constant 0 : i32
    %c0_i32_0 = arith.constant 0 : i32
    %c0_i32_1 = arith.constant 0 : i32
    return %c0_i32, %c0_i32_0 : i32, i32
  }
}

</mosaic_0001>

<llo_original>
// kernel: tpu_custom_call.1
$region0: #{tpu_custom_call.1}
  #allocation0 [shape = 'u32[]', space=smem, size = 0x4, offset = 0x4, fixed_abs, tag = 'smem constant byte address 0x4 - core index']
  #allocation1 [shape = 'u32[144,128]{1,0:T(1,128)}', space=vmem, size = 0x12000, scoped, tag = 'internal scratch']
  #allocation2 [shape = 'f32[16,32]{1,0:T(8,128)}', space=vmem, size = 0x2000, scoped, tag = 'scratch operand']
  %s0 = inlined_call_operand.hbm [shape: f32[32,32], index: 0, kind: input, shape index: {}]
  %s1 = inlined_call_operand.hbm [shape: f32[16,32], index: 1, kind: input, shape index: {}]
  %s2 = inlined_call_operand.hbm [shape: f32[32,32], index: 2, kind: input, shape index: {}]
  %s3 = inlined_call_operand.hbm [shape: f32[32,64], index: 3, kind: input, shape index: {}]
  %s4 = inlined_call_operand.hbm [shape: f32[32,128], index: 4, kind: input, shape index: {}]
  %s5 = inlined_call_operand.vmem [shape: f32[1,128], index: 5, kind: input, shape index: {}]
  %s6 = inlined_call_operand.hbm [shape: f32[16,128], index: 6, kind: output, shape index: {}]
  %s7 = sld [smem:[#allocation0]]
  $region54: #{tpu_custom_call.1} parent=0
    _
  %s9 = ssub.s32 1, %s7
  %s10 = scalar_select 0, %s9, %s7
  $region1: #{tpu_custom_call.1} parent=0
    #allocation3 [shape = 'u8[16384]{0}', space=vmem, size = 0x4000, scoped, tag = 'input window, operand 0, single buffered']
    #allocation4 [shape = 's32[1]{0}', space=sflag, size = 0x4, scoped, tag = 'scoped memory for tpu_custom_call.1']
    #allocation5 [shape = 's32[1]{0}', space=sflag, size = 0x4, scoped, tag = 'scoped memory for tpu_custom_call.1']
    #allocation6 [shape = 'u8[8192]{0}', space=vmem, size = 0x2000, scoped, tag = 'input window, operand 1, single buffered']
    #allocation7 [shape = 's32[1]{0}', space=sflag, size = 0x4, scoped, tag = 'scoped memory for tpu_custom_call.1']
    #allocation8 [shape = 'u8[16384]{0}', space=vmem, size = 0x4000, scoped, tag = 'input window, operand 2, single buffered']
    #allocation9 [shape = 'u8[16384]{0}', space=vmem, size = 0x4000, scoped, tag = 'input window, operand 3, single buffered']
    #allocation10 [shape = 's32[1]{0}', space=sflag, size = 0x4, scoped, tag = 'scoped memory for tpu_custom_call.1']
    #allocation11 [shape = 'u8[16384]{0}', space=vmem, size = 0x4000, scoped, tag = 'input window, operand 4, single buffered']
    #allocation12 [shape = 'u8[8192]{0}', space=vmem, size = 0x2000, scoped, tag = 'output window, operand 0, single buffered']
    %11 = vsyncpa [#allocation4], 0
    %12 = vsyncpa [#allocation7], 0
    %13 = vsyncpa [#allocation10], 0
    %14 = vsyncpa [#allocation5], 0
    // Predicated region
    $region2: #{tpu_custom_call.1} parent=1 // pred_check
      _
    $region3: #{tpu_custom_call.1} parent=1 // pred_check_branch
      %16 = sbr.rel (0) target = $region5
    $region4: #{tpu_custom_call.1} parent=1 // pred_region
      %s18 = ssub.s32 512, 512
      %19 = vsyncadd [#allocation4], %s18
      %s20 = sshll.u32 [#allocation3], 4
      %s21 = int_to_ptr.vmem [resolvable:$true] %s20
      %26 = dma.hbm_to_vmem [thread:$0]  %s0, 512, %s21, [#allocation4], 128, 128, 8
    $region5: #{tpu_custom_call.1} parent=1 // pred_fallthru
      _
    // Predicated region
    $region6: #{tpu_custom_call.1} parent=1 // pred_check
      _
    $region7: #{tpu_custom_call.1} parent=1 // pred_check_branch
      %28 = sbr.rel (0) target = $region9
    $region8: #{tpu_custom_call.1} parent=1 // pred_region
      %s30 = ssub.s32 256, 256
      %31 = vsyncadd [#allocation7], %s30
      %s32 = sshll.u32 [#allocation6], 4
      %s33 = int_to_ptr.vmem [resolvable:$true] %s32
      %38 = dma.hbm_to_vmem [thread:$0]  %s1, 256, %s33, [#allocation7], 128, 128, 8
    $region9: #{tpu_custom_call.1} parent=1 // pred_fallthru
      _
    // Predicated region
    $region10: #{tpu_custom_call.1} parent=1 // pred_check
      _
    $region11: #{tpu_custom_call.1} parent=1 // pred_check_branch
      %40 = sbr.rel (0) target = $region13
    $region12: #{tpu_custom_call.1} parent=1 // pred_region
      %s42 = ssub.s32 512, 512
      %43 = vsyncadd [#allocation7], %s42
      %s44 = sshll.u32 [#allocation8], 4
      %s45 = int_to_ptr.vmem [resolvable:$true] %s44
      %50 = dma.hbm_to_vmem [thread:$0]  %s2, 512, %s45, [#allocation7], 128, 128, 8
    $region13: #{tpu_custom_call.1} parent=1 // pred_fallthru
      _
    // Predicated region
    $region14: #{tpu_custom_call.1} parent=1 // pred_check
      _
    $region15: #{tpu_custom_call.1} parent=1 // pred_check_branch
      %52 = sbr.rel (0) target = $region17
    $region16: #{tpu_custom_call.1} parent=1 // pred_region
      %s54 = ssub.s32 512, 512
      %55 = vsyncadd [#allocation10], %s54
      %s56 = sshll.u32 [#allocation9], 4
      %s57 = int_to_ptr.vmem [resolvable:$true] %s56
      %62 = dma.hbm_to_vmem [thread:$0]  %s3, 512, %s57, [#allocation10], 128, 128, 8
    $region17: #{tpu_custom_call.1} parent=1 // pred_fallthru
      _
    // Predicated region
    $region18: #{tpu_custom_call.1} parent=1 // pred_check
      _
    $region19: #{tpu_custom_call.1} parent=1 // pred_check_branch
      %64 = sbr.rel (0) target = $region21
    $region20: #{tpu_custom_call.1} parent=1 // pred_region
      %s66 = ssub.s32 512, 512
      %67 = vsyncadd [#allocation10], %s66
      %s68 = sshll.u32 [#allocation11], 4
      %s69 = int_to_ptr.vmem [resolvable:$true] %s68
      %74 = dma.hbm_to_vmem [thread:$0]  %s4, 512, %s69, [#allocation10], 128, 128, 8
    $region21: #{tpu_custom_call.1} parent=1 // pred_fallthru
      _
    // Predicated region
    $region22: #{tpu_custom_call.1} parent=1 // pred_check
      _
    $region23: #{tpu_custom_call.1} parent=1 // pred_check_branch
      %76 = sbr.rel (0) target = $region25
    $region24: #{tpu_custom_call.1} parent=1 // pred_region
      _
    $region25: #{tpu_custom_call.1} parent=1 // pred_fallthru
      _
    // Predicated region
    $region26: #{tpu_custom_call.1} parent=1 // pred_check
      _
    $region27: #{tpu_custom_call.1} parent=1 // pred_check_branch
      %78 = sbr.rel (0) target = $region29
    $region28: #{tpu_custom_call.1} parent=1 // pred_region
      %79 = dma.done [#allocation4], 512
    $region29: #{tpu_custom_call.1} parent=1 // pred_fallthru
      _
    // Predicated region
    $region30: #{tpu_custom_call.1} parent=1 // pred_check
      _
    $region31: #{tpu_custom_call.1} parent=1 // pred_check_branch
      %81 = sbr.rel (0) target = $region33
    $region32: #{tpu_custom_call.1} parent=1 // pred_region
      %82 = dma.done [#allocation7], 256
    $region33: #{tpu_custom_call.1} parent=1 // pred_fallthru
      _
    // Predicated region
    $region34: #{tpu_custom_call.1} parent=1 // pred_check
      _
    $region35: #{tpu_custom_call.1} parent=1 // pred_check_branch
      %84 = sbr.rel (0) target = $region37
    $region36: #{tpu_custom_call.1} parent=1 // pred_region
      %85 = dma.done [#allocation7], 512
    $region37: #{tpu_custom_call.1} parent=1 // pred_fallthru
      _
    // Predicated region
    $region38: #{tpu_custom_call.1} parent=1 // pred_check
      _
    $region39: #{tpu_custom_call.1} parent=1 // pred_check_branch
      %87 = sbr.rel (0) target = $region41
    $region40: #{tpu_custom_call.1} parent=1 // pred_region
      %88 = dma.done [#allocation10], 512
    $region41: #{tpu_custom_call.1} parent=1 // pred_fallthru
      _
    // Predicated region
    $region42: #{tpu_custom_call.1} parent=1 // pred_check
      _
    $region43: #{tpu_custom_call.1} parent=1 // pred_check_branch
      %90 = sbr.rel (0) target = $region45
    $region44: #{tpu_custom_call.1} parent=1 // pred_region
      %91 = dma.done [#allocation10], 512
    $region45: #{tpu_custom_call.1} parent=1 // pred_fallthru
      _
    %v92 = vld [vmem:[#allocation3] sm:$0xff]
    %v93 = vld [vmem:[#allocation3 + $0x8] sm:$0xff]
    %v94 = vld [vmem:[#allocation3 + $0x10] sm:$0xff]
    %v95 = vld [vmem:[#allocation3 + $0x18] sm:$0xff]
    %v96 = vld [vmem:[#allocation6] sm:$0xff]
    %v97 = vld [vmem:[#allocation6 + $0x8] sm:$0xff]
    %v98 = vld [vmem:[#allocation8] sm:$0xff]
    %v99 = vld [vmem:[#allocation8 + $0x8] sm:$0xff]
    %v100 = vld [vmem:[#allocation8 + $0x10] sm:$0xff]
    %v101 = vld [vmem:[#allocation8 + $0x18] sm:$0xff]
    %vm102 = vcmask 261120
    %v104 = vsel %vm102, %v96, 0
    %v107 = vsel %vm102, %v97, 0
    %109 = vmatprep.subr.mxu0 0.0
    %110 = vmatpush1.msra.mxu0 0.0
    %111 = vmatprep.subr.mxu0 0.0
    %112 = vmatpush1.msra.mxu0 0.0
    %113 = vmatprep.subr.mxu0 0.0
    %114 = vmatpush1.msra.mxu0 0.0
    %115 = vmatprep.subr.mxu0 0.0
    %116 = vmatpush1.msra.mxu0 0.0
    %117 = vmatprep.subr.mxu0 0.0
    %118 = vmatpush1.msra.mxu0 0.0
    %119 = vmatprep.subr.mxu0 0.0
    %120 = vmatpush1.msra.mxu0 0.0
    %121 = vmatprep.subr.mxu0 0.0
    %122 = vmatpush1.msra.mxu0 0.0
    %123 = vmatprep.subr.mxu0 0.0
    %124 = vmatpush1.msra.mxu0 0.0
    %125 = vmatprep.subr.mxu0 0.0
    %126 = vmatpush1.msra.mxu0 0.0
    %127 = vmatprep.subr.mxu0 0.0
    %128 = vmatpush1.msra.mxu0 0.0
    %129 = vmatprep.subr.mxu0 0.0
    %130 = vmatpush1.msra.mxu0 0.0
    %131 = vmatprep.subr.mxu0 0.0
    %132 = vmatpush1.msra.mxu0 0.0
    %133 = vmatprep.subr.mxu0 0.0
    %134 = vmatpush1.msra.mxu0 %v101
    %135 = vmatprep.subr.mxu0 0.0
    %136 = vmatpush1.msra.mxu0 %v100
    %137 = vmatprep.subr.mxu0 0.0
    %138 = vmatpush1.msra.mxu0 %v99
    %139 = vmatprep.subr.mxu0 0.0
    %140 = vmatpush1.msra.mxu0 %v98
    %141 = vmatprep.subr.mxu0 0.0
    %142 = vmatpush2.msra.mxu0 0.0
    %143 = vmatprep.subr.mxu0 0.0
    %144 = vmatpush2.msra.mxu0 0.0
    %145 = vmatprep.subr.mxu0 0.0
    %146 = vmatpush2.msra.mxu0 0.0
    %147 = vmatprep.subr.mxu0 0.0
    %148 = vmatpush2.msra.mxu0 0.0
    %149 = vmatprep.subr.mxu0 0.0
    %150 = vmatpush2.msra.mxu0 0.0
    %151 = vmatprep.subr.mxu0 0.0
    %152 = vmatpush2.msra.mxu0 0.0
    %153 = vmatprep.subr.mxu0 0.0
    %154 = vmatpush2.msra.mxu0 0.0
    %155 = vmatprep.subr.mxu0 0.0
    %156 = vmatpush2.msra.mxu0 0.0
    %157 = vmatprep.subr.mxu0 0.0
    %158 = vmatpush2.msra.mxu0 0.0
    %159 = vmatprep.subr.mxu0 0.0
    %160 = vmatpush2.msra.mxu0 0.0
    %161 = vmatprep.subr.mxu0 0.0
    %162 = vmatpush2.msra.mxu0 0.0
    %163 = vmatprep.subr.mxu0 0.0
    %164 = vmatpush2.msra.mxu0 0.0
    %165 = vmatprep.subr.mxu0 0.0
    %166 = vmatpush2.msra.mxu0 0.0
    %167 = vmatprep.subr.mxu0 0.0
    %168 = vmatpush2.msra.mxu0 0.0
    %169 = vmatprep.subr.mxu0 0.0
    %170 = vmatpush2.msra.mxu0 0.0
    %171 = vmatprep.subr.mxu0 0.0
    %172 = vmatpush2.msra.mxu0 0.0
    %173 = vmatprep.mubr.f32.mxu0 0.0
    %174 = vmatmul.mubr.f32.gmra.mxu0 %v104
    %v175 = vpop.f32.mrf.mxu0
    %v176 = vadd.f32 0.0, %v175
    %v177 = vpop.f32.mrf.mxu0
    %178 = vmatprep.mubr.f32.mxu0 0.0
    %179 = vmatmul.mubr.f32.gmra.mxu0 %v107
    %v180 = vpop.f32.mrf.mxu0
    %v181 = vadd.f32 0.0, %v180
    %v182 = vpop.f32.mrf.mxu0
    %183 = vdwg.mxu0
    %v184 = vld [vmem:[#allocation9] sm:$0xff]
    %v185 = vld [vmem:[#allocation9 + $0x8] sm:$0xff]
    %v186 = vld [vmem:[#allocation9 + $0x10] sm:$0xff]
    %v187 = vld [vmem:[#allocation9 + $0x18] sm:$0xff]
    %v189 = vsel %vm102, %v92, 0
    %v192 = vsel %vm102, %v93, 0
    %v195 = vsel %vm102, %v94, 0
    %v198 = vsel %vm102, %v95, 0
    %200 = vmatprep.subr.mxu0 0.0
    %201 = vmatpush1.msra.mxu0 0.0
    %202 = vmatprep.subr.mxu0 0.0
    %203 = vmatpush1.msra.mxu0 0.0
    %204 = vmatprep.subr.mxu0 0.0
    %205 = vmatpush1.msra.mxu0 0.0
    %206 = vmatprep.subr.mxu0 0.0
    %207 = vmatpush1.msra.mxu0 0.0
    %208 = vmatprep.subr.mxu0 0.0
    %209 = vmatpush1.msra.mxu0 0.0
    %210 = vmatprep.subr.mxu0 0.0
    %211 = vmatpush1.msra.mxu0 0.0
    %212 = vmatprep.subr.mxu0 0.0
    %213 = vmatpush1.msra.mxu0 0.0
    %214 = vmatprep.subr.mxu0 0.0
    %215 = vmatpush1.msra.mxu0 0.0
    %216 = vmatprep.subr.mxu0 0.0
    %217 = vmatpush1.msra.mxu0 0.0
    %218 = vmatprep.subr.mxu0 0.0
    %219 = vmatpush1.msra.mxu0 0.0
    %220 = vmatprep.subr.mxu0 0.0
    %221 = vmatpush1.msra.mxu0 0.0
    %222 = vmatprep.subr.mxu0 0.0
    %223 = vmatpush1.msra.mxu0 0.0
    %224 = vmatprep.subr.mxu0 0.0
    %225 = vmatpush1.msra.mxu0 %v187
    %226 = vmatprep.subr.mxu0 0.0
    %227 = vmatpush1.msra.mxu0 %v186
    %228 = vmatprep.subr.mxu0 0.0
    %229 = vmatpush1.msra.mxu0 %v185
    %230 = vmatprep.subr.mxu0 0.0
    %231 = vmatpush1.msra.mxu0 %v184
    %232 = vmatprep.subr.mxu0 0.0
    %233 = vmatpush2.msra.mxu0 0.0
    %234 = vmatprep.subr.mxu0 0.0
    %235 = vmatpush2.msra.mxu0 0.0
    %236 = vmatprep.subr.mxu0 0.0
    %237 = vmatpush2.msra.mxu0 0.0
    %238 = vmatprep.subr.mxu0 0.0
    %239 = vmatpush2.msra.mxu0 0.0
    %240 = vmatprep.subr.mxu0 0.0
    %241 = vmatpush2.msra.mxu0 0.0
    %242 = vmatprep.subr.mxu0 0.0
    %243 = vmatpush2.msra.mxu0 0.0
    %244 = vmatprep.subr.mxu0 0.0
    %245 = vmatpush2.msra.mxu0 0.0
    %246 = vmatprep.subr.mxu0 0.0
    %247 = vmatpush2.msra.mxu0 0.0
    %248 = vmatprep.subr.mxu0 0.0
    %249 = vmatpush2.msra.mxu0 0.0
    %250 = vmatprep.subr.mxu0 0.0
    %251 = vmatpush2.msra.mxu0 0.0
    %252 = vmatprep.subr.mxu0 0.0
    %253 = vmatpush2.msra.mxu0 0.0
    %254 = vmatprep.subr.mxu0 0.0
    %255 = vmatpush2.msra.mxu0 0.0
    %256 = vmatprep.subr.mxu0 0.0
    %257 = vmatpush2.msra.mxu0 0.0
    %258 = vmatprep.subr.mxu0 0.0
    %259 = vmatpush2.msra.mxu0 0.0
    %260 = vmatprep.subr.mxu0 0.0
    %261 = vmatpush2.msra.mxu0 0.0
    %262 = vmatprep.subr.mxu0 0.0
    %263 = vmatpush2.msra.mxu0 0.0
    %264 = vmatprep.mubr.f32.mxu0 0.0
    %265 = vmatmul.mubr.f32.gmra.mxu0 %v189
    %v266 = vpop.f32.mrf.mxu0
    %v267 = vadd.f32 0.0, %v266
    %v268 = vpop.f32.mrf.mxu0
    %269 = vmatprep.mubr.f32.mxu0 0.0
    %270 = vmatmul.mubr.f32.gmra.mxu0 %v192
    %v271 = vpop.f32.mrf.mxu0
    %v272 = vadd.f32 0.0, %v271
    %v273 = vpop.f32.mrf.mxu0
    %274 = vmatprep.mubr.f32.mxu0 0.0
    %275 = vmatmul.mubr.f32.gmra.mxu0 %v195
    %v276 = vpop.f32.mrf.mxu0
    %v277 = vadd.f32 0.0, %v276
    %v278 = vpop.f32.mrf.mxu0
    %279 = vmatprep.mubr.f32.mxu0 0.0
    %280 = vmatmul.mubr.f32.gmra.mxu0 %v198
    %v281 = vpop.f32.mrf.mxu0
    %v282 = vadd.f32 0.0, %v281
    %v283 = vpop.f32.mrf.mxu0
    %284 = vdwg.mxu0
    %vm285 = vcmask 130048
    %v287 = vsel %vm285, %v176, 0
    %v290 = vsel %vm285, %v267, 0
    %v293 = vsel %vm285, %v272, 0
    %295 = vmatprep.subr.mxu0 0.0
    %296 = vmatpush1.xpose.msra.mxu0 0.0
    %297 = vmatprep.subr.mxu0 0.0
    %298 = vmatpush1.xpose.msra.mxu0 0.0
    %299 = vmatprep.subr.mxu0 0.0
    %300 = vmatpush1.xpose.msra.mxu0 0.0
    %301 = vmatprep.subr.mxu0 0.0
    %302 = vmatpush1.xpose.msra.mxu0 0.0
    %303 = vmatprep.subr.mxu0 0.0
    %304 = vmatpush1.xpose.msra.mxu0 0.0
    %305 = vmatprep.subr.mxu0 0.0
    %306 = vmatpush1.xpose.msra.mxu0 0.0
    %307 = vmatprep.subr.mxu0 0.0
    %308 = vmatpush1.xpose.msra.mxu0 0.0
    %309 = vmatprep.subr.mxu0 0.0
    %310 = vmatpush1.xpose.msra.mxu0 0.0
    %311 = vmatprep.subr.mxu0 0.0
    %312 = vmatpush1.xpose.msra.mxu0 0.0
    %313 = vmatprep.subr.mxu0 0.0
    %314 = vmatpush1.xpose.msra.mxu0 0.0
    %315 = vmatprep.subr.mxu0 0.0
    %316 = vmatpush1.xpose.msra.mxu0 0.0
    %317 = vmatprep.subr.mxu0 0.0
    %318 = vmatpush1.xpose.msra.mxu0 0.0
    %319 = vmatprep.subr.mxu0 0.0
    %320 = vmatpush1.xpose.msra.mxu0 0.0
    %321 = vmatprep.subr.mxu0 0.0
    %322 = vmatpush1.xpose.msra.mxu0 0.0
    %323 = vmatprep.subr.mxu0 0.0
    %324 = vmatpush1.xpose.msra.mxu0 %v293
    %325 = vmatprep.subr.mxu0 0.0
    %326 = vmatpush1.xpose.msra.mxu0 %v290
    %327 = vmatprep.subr.mxu0 0.0
    %328 = vmatpush2.xpose.msra.mxu0 0.0
    %329 = vmatprep.subr.mxu0 0.0
    %330 = vmatpush2.xpose.msra.mxu0 0.0
    %331 = vmatprep.subr.mxu0 0.0
    %332 = vmatpush2.xpose.msra.mxu0 0.0
    %333 = vmatprep.subr.mxu0 0.0
    %334 = vmatpush2.xpose.msra.mxu0 0.0
    %335 = vmatprep.subr.mxu0 0.0
    %336 = vmatpush2.xpose.msra.mxu0 0.0
    %337 = vmatprep.subr.mxu0 0.0
    %338 = vmatpush2.xpose.msra.mxu0 0.0
    %339 = vmatprep.subr.mxu0 0.0
    %340 = vmatpush2.xpose.msra.mxu0 0.0
    %341 = vmatprep.subr.mxu0 0.0
    %342 = vmatpush2.xpose.msra.mxu0 0.0
    %343 = vmatprep.subr.mxu0 0.0
    %344 = vmatpush2.xpose.msra.mxu0 0.0
    %345 = vmatprep.subr.mxu0 0.0
    %346 = vmatpush2.xpose.msra.mxu0 0.0
    %347 = vmatprep.subr.mxu0 0.0
    %348 = vmatpush2.xpose.msra.mxu0 0.0
    %349 = vmatprep.subr.mxu0 0.0
    %350 = vmatpush2.xpose.msra.mxu0 0.0
    %351 = vmatprep.subr.mxu0 0.0
    %352 = vmatpush2.xpose.msra.mxu0 0.0
    %353 = vmatprep.subr.mxu0 0.0
    %354 = vmatpush2.xpose.msra.mxu0 0.0
    %355 = vmatprep.subr.mxu0 0.0
    %356 = vmatpush2.xpose.msra.mxu0 0.0
    %357 = vmatprep.subr.mxu0 0.0
    %358 = vmatpush2.xpose.msra.mxu0 0.0
    %359 = vmatprep.mubr.f32.mxu0 0.0
    %360 = vmatmul.mubr.f32.gmra.mxu0 %v287
    %v361 = vpop.f32.mrf.mxu0
    %v362 = vadd.f32 0.0, %v361
    %v363 = vpop.f32.mrf.mxu0
    %364 = vdwg.mxu0
    %v365 = vsel %vm285, %v362, -inf
    %366 = vmax.xlane.f32.xlu0 %v365
    %v367 = vpop.xlane.xlu0 %366
    %v368 = vsub.f32 %v362, %v367
    %v369 = vmul.f32 %v368, 1.442695
    %v370 = vpow.pop %v369
    %v371 = vsel %vm285, %v370, 0.0
    %372 = vadd.xlane.f32.xlu0 %v371
    %v373 = vpop.xlane.xlu0 %372
    %v374 = vrcp.pop %v373
    %v375 = vmul.f32 %v370, %v374
    %376 = vrot.lane.b32.xlu0 %v267, 96
    %v377 = vpop.permute.xlu0 %376
    %378 = vrot.lane.b32.xlu0 %v272, 96
    %v379 = vpop.permute.xlu0 %378
    %v383 = vsel %vm285, %v375, 0
    %385 = vmatprep.subr.mxu0 0.0
    %386 = vmatpush1.msra.mxu0 0.0
    %387 = vmatprep.subr.mxu0 0.0
    %388 = vmatpush1.msra.mxu0 0.0
    %389 = vmatprep.subr.mxu0 0.0
    %390 = vmatpush1.msra.mxu0 0.0
    %391 = vmatprep.subr.mxu0 0.0
    %392 = vmatpush1.msra.mxu0 0.0
    %393 = vmatprep.subr.mxu0 0.0
    %394 = vmatpush1.msra.mxu0 0.0
    %395 = vmatprep.subr.mxu0 0.0
    %396 = vmatpush1.msra.mxu0 0.0
    %397 = vmatprep.subr.mxu0 0.0
    %398 = vmatpush1.msra.mxu0 0.0
    %399 = vmatprep.subr.mxu0 0.0
    %400 = vmatpush1.msra.mxu0 0.0
    %401 = vmatprep.subr.mxu0 0.0
    %402 = vmatpush1.msra.mxu0 0.0
    %403 = vmatprep.subr.mxu0 0.0
    %404 = vmatpush1.msra.mxu0 0.0
    %405 = vmatprep.subr.mxu0 0.0
    %406 = vmatpush1.msra.mxu0 0.0
    %407 = vmatprep.subr.mxu0 0.0
    %408 = vmatpush1.msra.mxu0 0.0
    %409 = vmatprep.subr.mxu0 0.0
    %410 = vmatpush1.msra.mxu0 0.0
    %411 = vmatprep.subr.mxu0 0.0
    %412 = vmatpush1.msra.mxu0 0.0
    %413 = vmatprep.subr.mxu0 0.0
    %414 = vmatpush1.msra.mxu0 %v379
    %415 = vmatprep.subr.mxu0 0.0
    %416 = vmatpush1.msra.mxu0 %v377
    %417 = vmatprep.subr.mxu0 0.0
    %418 = vmatpush2.msra.mxu0 0.0
    %419 = vmatprep.subr.mxu0 0.0
    %420 = vmatpush2.msra.mxu0 0.0
    %421 = vmatprep.subr.mxu0 0.0
    %422 = vmatpush2.msra.mxu0 0.0
    %423 = vmatprep.subr.mxu0 0.0
    %424 = vmatpush2.msra.mxu0 0.0
    %425 = vmatprep.subr.mxu0 0.0
    %426 = vmatpush2.msra.mxu0 0.0
    %427 = vmatprep.subr.mxu0 0.0
    %428 = vmatpush2.msra.mxu0 0.0
    %429 = vmatprep.subr.mxu0 0.0
    %430 = vmatpush2.msra.mxu0 0.0
    %431 = vmatprep.subr.mxu0 0.0
    %432 = vmatpush2.msra.mxu0 0.0
    %433 = vmatprep.subr.mxu0 0.0
    %434 = vmatpush2.msra.mxu0 0.0
    %435 = vmatprep.subr.mxu0 0.0
    %436 = vmatpush2.msra.mxu0 0.0
    %437 = vmatprep.subr.mxu0 0.0
    %438 = vmatpush2.msra.mxu0 0.0
    %439 = vmatprep.subr.mxu0 0.0
    %440 = vmatpush2.msra.mxu0 0.0
    %441 = vmatprep.subr.mxu0 0.0
    %442 = vmatpush2.msra.mxu0 0.0
    %443 = vmatprep.subr.mxu0 0.0
    %444 = vmatpush2.msra.mxu0 0.0
    %445 = vmatprep.subr.mxu0 0.0
    %446 = vmatpush2.msra.mxu0 0.0
    %447 = vmatprep.subr.mxu0 0.0
    %448 = vmatpush2.msra.mxu0 0.0
    %449 = vmatprep.mubr.f32.mxu0 0.0
    %450 = vmatmul.mubr.f32.gmra.mxu0 %v383
    %v451 = vpop.f32.mrf.mxu0
    %v452 = vadd.f32 0.0, %v451
    %v453 = vpop.f32.mrf.mxu0
    %454 = vdwg.mxu0
    %455 = vst.msk [vmem:[#allocation2] sm:$0xff] %vm285, %v452
    %456 = vrot.lane.b32.xlu0 %v176, 112
    %v457 = vpop.permute.xlu0 %456
    %458 = vrot.lane.b32.xlu0 %v267, 112
    %v459 = vpop.permute.xlu0 %458
    %460 = vrot.lane.b32.xlu0 %v272, 112
    %v461 = vpop.permute.xlu0 %460
    %v462 = vsel %vm285, %v457, 0
    %v464 = vsel %vm285, %v459, 0
    %v466 = vsel %vm285, %v461, 0
    %468 = vmatprep.subr.mxu0 0.0
    %469 = vmatpush1.xpose.msra.mxu0 0.0
    %470 = vmatprep.subr.mxu0 0.0
    %471 = vmatpush1.xpose.msra.mxu0 0.0
    %472 = vmatprep.subr.mxu0 0.0
    %473 = vmatpush1.xpose.msra.mxu0 0.0
    %474 = vmatprep.subr.mxu0 0.0
    %475 = vmatpush1.xpose.msra.mxu0 0.0
    %476 = vmatprep.subr.mxu0 0.0
    %477 = vmatpush1.xpose.msra.mxu0 0.0
    %478 = vmatprep.subr.mxu0 0.0
    %479 = vmatpush1.xpose.msra.mxu0 0.0
    %480 = vmatprep.subr.mxu0 0.0
    %481 = vmatpush1.xpose.msra.mxu0 0.0
    %482 = vmatprep.subr.mxu0 0.0
    %483 = vmatpush1.xpose.msra.mxu0 0.0
    %484 = vmatprep.subr.mxu0 0.0
    %485 = vmatpush1.xpose.msra.mxu0 0.0
    %486 = vmatprep.subr.mxu0 0.0
    %487 = vmatpush1.xpose.msra.mxu0 0.0
    %488 = vmatprep.subr.mxu0 0.0
    %489 = vmatpush1.xpose.msra.mxu0 0.0
    %490 = vmatprep.subr.mxu0 0.0
    %491 = vmatpush1.xpose.msra.mxu0 0.0
    %492 = vmatprep.subr.mxu0 0.0
    %493 = vmatpush1.xpose.msra.mxu0 0.0
    %494 = vmatprep.subr.mxu0 0.0
    %495 = vmatpush1.xpose.msra.mxu0 0.0
    %496 = vmatprep.subr.mxu0 0.0
    %497 = vmatpush1.xpose.msra.mxu0 %v466
    %498 = vmatprep.subr.mxu0 0.0
    %499 = vmatpush1.xpose.msra.mxu0 %v464
    %500 = vmatprep.subr.mxu0 0.0
    %501 = vmatpush2.xpose.msra.mxu0 0.0
    %502 = vmatprep.subr.mxu0 0.0
    %503 = vmatpush2.xpose.msra.mxu0 0.0
    %504 = vmatprep.subr.mxu0 0.0
    %505 = vmatpush2.xpose.msra.mxu0 0.0
    %506 = vmatprep.subr.mxu0 0.0
    %507 = vmatpush2.xpose.msra.mxu0 0.0
    %508 = vmatprep.subr.mxu0 0.0
    %509 = vmatpush2.xpose.msra.mxu0 0.0
    %510 = vmatprep.subr.mxu0 0.0
    %511 = vmatpush2.xpose.msra.mxu0 0.0
    %512 = vmatprep.subr.mxu0 0.0
    %513 = vmatpush2.xpose.msra.mxu0 0.0
    %514 = vmatprep.subr.mxu0 0.0
    %515 = vmatpush2.xpose.msra.mxu0 0.0
    %516 = vmatprep.subr.mxu0 0.0
    %517 = vmatpush2.xpose.msra.mxu0 0.0
    %518 = vmatprep.subr.mxu0 0.0
    %519 = vmatpush2.xpose.msra.mxu0 0.0
    %520 = vmatprep.subr.mxu0 0.0
    %521 = vmatpush2.xpose.msra.mxu0 0.0
    %522 = vmatprep.subr.mxu0 0.0
    %523 = vmatpush2.xpose.msra.mxu0 0.0
    %524 = vmatprep.subr.mxu0 0.0
    %525 = vmatpush2.xpose.msra.mxu0 0.0
    %526 = vmatprep.subr.mxu0 0.0
    %527 = vmatpush2.xpose.msra.mxu0 0.0
    %528 = vmatprep.subr.mxu0 0.0
    %529 = vmatpush2.xpose.msra.mxu0 0.0
    %530 = vmatprep.subr.mxu0 0.0
    %531 = vmatpush2.xpose.msra.mxu0 0.0
    %532 = vmatprep.mubr.f32.mxu0 0.0
    %533 = vmatmul.mubr.f32.gmra.mxu0 %v462
    %v534 = vpop.f32.mrf.mxu0
    %v535 = vadd.f32 0.0, %v534
    %v536 = vpop.f32.mrf.mxu0
    %537 = vdwg.mxu0
    %v538 = vsel %vm285, %v535, -inf
    %539 = vmax.xlane.f32.xlu0 %v538
    %v540 = vpop.xlane.xlu0 %539
    %v541 = vsub.f32 %v535, %v540
    %v542 = vmul.f32 %v541, 1.442695
    %v543 = vpow.pop %v542
    %v544 = vsel %vm285, %v543, 0.0
    %545 = vadd.xlane.f32.xlu0 %v544
    %v546 = vpop.xlane.xlu0 %545
    %v547 = vrcp.pop %v546
    %v548 = vmul.f32 %v543, %v547
    %549 = vrot.lane.b32.xlu0 %v267, 80
    %v550 = vpop.permute.xlu0 %549
    %551 = vrot.lane.b32.xlu0 %v272, 80
    %v552 = vpop.permute.xlu0 %551
    %v556 = vsel %vm285, %v548, 0
    %558 = vmatprep.subr.mxu0 0.0
    %559 = vmatpush1.msra.mxu0 0.0
    %560 = vmatprep.subr.mxu0 0.0
    %561 = vmatpush1.msra.mxu0 0.0
    %562 = vmatprep.subr.mxu0 0.0
    %563 = vmatpush1.msra.mxu0 0.0
    %564 = vmatprep.subr.mxu0 0.0
    %565 = vmatpush1.msra.mxu0 0.0
    %566 = vmatprep.subr.mxu0 0.0
    %567 = vmatpush1.msra.mxu0 0.0
    %568 = vmatprep.subr.mxu0 0.0
    %569 = vmatpush1.msra.mxu0 0.0
    %570 = vmatprep.subr.mxu0 0.0
    %571 = vmatpush1.msra.mxu0 0.0
    %572 = vmatprep.subr.mxu0 0.0
    %573 = vmatpush1.msra.mxu0 0.0
    %574 = vmatprep.subr.mxu0 0.0
    %575 = vmatpush1.msra.mxu0 0.0
    %576 = vmatprep.subr.mxu0 0.0
    %577 = vmatpush1.msra.mxu0 0.0
    %578 = vmatprep.subr.mxu0 0.0
    %579 = vmatpush1.msra.mxu0 0.0
    %580 = vmatprep.subr.mxu0 0.0
    %581 = vmatpush1.msra.mxu0 0.0
    %582 = vmatprep.subr.mxu0 0.0
    %583 = vmatpush1.msra.mxu0 0.0
    %584 = vmatprep.subr.mxu0 0.0
    %585 = vmatpush1.msra.mxu0 0.0
    %586 = vmatprep.subr.mxu0 0.0
    %587 = vmatpush1.msra.mxu0 %v552
    %588 = vmatprep.subr.mxu0 0.0
    %589 = vmatpush1.msra.mxu0 %v550
    %590 = vmatprep.subr.mxu0 0.0
    %591 = vmatpush2.msra.mxu0 0.0
    %592 = vmatprep.subr.mxu0 0.0
    %593 = vmatpush2.msra.mxu0 0.0
    %594 = vmatprep.subr.mxu0 0.0
    %595 = vmatpush2.msra.mxu0 0.0
    %596 = vmatprep.subr.mxu0 0.0
    %597 = vmatpush2.msra.mxu0 0.0
    %598 = vmatprep.subr.mxu0 0.0
    %599 = vmatpush2.msra.mxu0 0.0
    %600 = vmatprep.subr.mxu0 0.0
    %601 = vmatpush2.msra.mxu0 0.0
    %602 = vmatprep.subr.mxu0 0.0
    %603 = vmatpush2.msra.mxu0 0.0
    %604 = vmatprep.subr.mxu0 0.0
    %605 = vmatpush2.msra.mxu0 0.0
    %606 = vmatprep.subr.mxu0 0.0
    %607 = vmatpush2.msra.mxu0 0.0
    %608 = vmatprep.subr.mxu0 0.0
    %609 = vmatpush2.msra.mxu0 0.0
    %610 = vmatprep.subr.mxu0 0.0
    %611 = vmatpush2.msra.mxu0 0.0
    %612 = vmatprep.subr.mxu0 0.0
    %613 = vmatpush2.msra.mxu0 0.0
    %614 = vmatprep.subr.mxu0 0.0
    %615 = vmatpush2.msra.mxu0 0.0
    %616 = vmatprep.subr.mxu0 0.0
    %617 = vmatpush2.msra.mxu0 0.0
    %618 = vmatprep.subr.mxu0 0.0
    %619 = vmatpush2.msra.mxu0 0.0
    %620 = vmatprep.subr.mxu0 0.0
    %621 = vmatpush2.msra.mxu0 0.0
    %622 = vmatprep.mubr.f32.mxu0 0.0
    %623 = vmatmul.mubr.f32.gmra.mxu0 %v556
    %v624 = vpop.f32.mrf.mxu0
    %v625 = vadd.f32 0.0, %v624
    %v626 = vpop.f32.mrf.mxu0
    %627 = vdwg.mxu0
    %629 = vrot.lane.b32.xlu0 %v625, 16
    %v630 = vpop.permute.xlu0 %629
    %vm632 = vcmask 261248
    %633 = vst.msk [vmem:[#allocation2] sm:$0xff] %vm632, %v630
    %v635 = vsel %vm285, %v181, 0
    %v638 = vsel %vm285, %v277, 0
    %v641 = vsel %vm285, %v282, 0
    %643 = vmatprep.subr.mxu0 0.0
    %644 = vmatpush1.xpose.msra.mxu0 0.0
    %645 = vmatprep.subr.mxu0 0.0
    %646 = vmatpush1.xpose.msra.mxu0 0.0
    %647 = vmatprep.subr.mxu0 0.0
    %648 = vmatpush1.xpose.msra.mxu0 0.0
    %649 = vmatprep.subr.mxu0 0.0
    %650 = vmatpush1.xpose.msra.mxu0 0.0
    %651 = vmatprep.subr.mxu0 0.0
    %652 = vmatpush1.xpose.msra.mxu0 0.0
    %653 = vmatprep.subr.mxu0 0.0
    %654 = vmatpush1.xpose.msra.mxu0 0.0
    %655 = vmatprep.subr.mxu0 0.0
    %656 = vmatpush1.xpose.msra.mxu0 0.0
    %657 = vmatprep.subr.mxu0 0.0
    %658 = vmatpush1.xpose.msra.mxu0 0.0
    %659 = vmatprep.subr.mxu0 0.0
    %660 = vmatpush1.xpose.msra.mxu0 0.0
    %661 = vmatprep.subr.mxu0 0.0
    %662 = vmatpush1.xpose.msra.mxu0 0.0
    %663 = vmatprep.subr.mxu0 0.0
    %664 = vmatpush1.xpose.msra.mxu0 0.0
    %665 = vmatprep.subr.mxu0 0.0
    %666 = vmatpush1.xpose.msra.mxu0 0.0
    %667 = vmatprep.subr.mxu0 0.0
    %668 = vmatpush1.xpose.msra.mxu0 0.0
    %669 = vmatprep.subr.mxu0 0.0
    %670 = vmatpush1.xpose.msra.mxu0 0.0
    %671 = vmatprep.subr.mxu0 0.0
    %672 = vmatpush1.xpose.msra.mxu0 %v641
    %673 = vmatprep.subr.mxu0 0.0
    %674 = vmatpush1.xpose.msra.mxu0 %v638
    %675 = vmatprep.subr.mxu0 0.0
    %676 = vmatpush2.xpose.msra.mxu0 0.0
    %677 = vmatprep.subr.mxu0 0.0
    %678 = vmatpush2.xpose.msra.mxu0 0.0
    %679 = vmatprep.subr.mxu0 0.0
    %680 = vmatpush2.xpose.msra.mxu0 0.0
    %681 = vmatprep.subr.mxu0 0.0
    %682 = vmatpush2.xpose.msra.mxu0 0.0
    %683 = vmatprep.subr.mxu0 0.0
    %684 = vmatpush2.xpose.msra.mxu0 0.0
    %685 = vmatprep.subr.mxu0 0.0
    %686 = vmatpush2.xpose.msra.mxu0 0.0
    %687 = vmatprep.subr.mxu0 0.0
    %688 = vmatpush2.xpose.msra.mxu0 0.0
    %689 = vmatprep.subr.mxu0 0.0
    %690 = vmatpush2.xpose.msra.mxu0 0.0
    %691 = vmatprep.subr.mxu0 0.0
    %692 = vmatpush2.xpose.msra.mxu0 0.0
    %693 = vmatprep.subr.mxu0 0.0
    %694 = vmatpush2.xpose.msra.mxu0 0.0
    %695 = vmatprep.subr.mxu0 0.0
    %696 = vmatpush2.xpose.msra.mxu0 0.0
    %697 = vmatprep.subr.mxu0 0.0
    %698 = vmatpush2.xpose.msra.mxu0 0.0
    %699 = vmatprep.subr.mxu0 0.0
    %700 = vmatpush2.xpose.msra.mxu0 0.0
    %701 = vmatprep.subr.mxu0 0.0
    %702 = vmatpush2.xpose.msra.mxu0 0.0
    %703 = vmatprep.subr.mxu0 0.0
    %704 = vmatpush2.xpose.msra.mxu0 0.0
    %705 = vmatprep.subr.mxu0 0.0
    %706 = vmatpush2.xpose.msra.mxu0 0.0
    %707 = vmatprep.mubr.f32.mxu0 0.0
    %708 = vmatmul.mubr.f32.gmra.mxu0 %v635
    %v709 = vpop.f32.mrf.mxu0
    %v710 = vadd.f32 0.0, %v709
    %v711 = vpop.f32.mrf.mxu0
    %712 = vdwg.mxu0
    %v713 = vsel %vm285, %v710, -inf
    %714 = vmax.xlane.f32.xlu0 %v713
    %v715 = vpop.xlane.xlu0 %714
    %v716 = vsub.f32 %v710, %v715
    %v717 = vmul.f32 %v716, 1.442695
    %v718 = vpow.pop %v717
    %v719 = vsel %vm285, %v718, 0.0
    %720 = vadd.xlane.f32.xlu0 %v719
    %v721 = vpop.xlane.xlu0 %720
    %v722 = vrcp.pop %v721
    %v723 = vmul.f32 %v718, %v722
    %724 = vrot.lane.b32.xlu0 %v277, 96
    %v725 = vpop.permute.xlu0 %724
    %726 = vrot.lane.b32.xlu0 %v282, 96
    %v727 = vpop.permute.xlu0 %726
    %v731 = vsel %vm285, %v723, 0
    %733 = vmatprep.subr.mxu0 0.0
    %734 = vmatpush1.msra.mxu0 0.0
    %735 = vmatprep.subr.mxu0 0.0
    %736 = vmatpush1.msra.mxu0 0.0
    %737 = vmatprep.subr.mxu0 0.0
    %738 = vmatpush1.msra.mxu0 0.0
    %739 = vmatprep.subr.mxu0 0.0
    %740 = vmatpush1.msra.mxu0 0.0
    %741 = vmatprep.subr.mxu0 0.0
    %742 = vmatpush1.msra.mxu0 0.0
    %743 = vmatprep.subr.mxu0 0.0
    %744 = vmatpush1.msra.mxu0 0.0
    %745 = vmatprep.subr.mxu0 0.0
    %746 = vmatpush1.msra.mxu0 0.0
    %747 = vmatprep.subr.mxu0 0.0
    %748 = vmatpush1.msra.mxu0 0.0
    %749 = vmatprep.subr.mxu0 0.0
    %750 = vmatpush1.msra.mxu0 0.0
    %751 = vmatprep.subr.mxu0 0.0
    %752 = vmatpush1.msra.mxu0 0.0
    %753 = vmatprep.subr.mxu0 0.0
    %754 = vmatpush1.msra.mxu0 0.0
    %755 = vmatprep.subr.mxu0 0.0
    %756 = vmatpush1.msra.mxu0 0.0
    %757 = vmatprep.subr.mxu0 0.0
    %758 = vmatpush1.msra.mxu0 0.0
    %759 = vmatprep.subr.mxu0 0.0
    %760 = vmatpush1.msra.mxu0 0.0
    %761 = vmatprep.subr.mxu0 0.0
    %762 = vmatpush1.msra.mxu0 %v727
    %763 = vmatprep.subr.mxu0 0.0
    %764 = vmatpush1.msra.mxu0 %v725
    %765 = vmatprep.subr.mxu0 0.0
    %766 = vmatpush2.msra.mxu0 0.0
    %767 = vmatprep.subr.mxu0 0.0
    %768 = vmatpush2.msra.mxu0 0.0
    %769 = vmatprep.subr.mxu0 0.0
    %770 = vmatpush2.msra.mxu0 0.0
    %771 = vmatprep.subr.mxu0 0.0
    %772 = vmatpush2.msra.mxu0 0.0
    %773 = vmatprep.subr.mxu0 0.0
    %774 = vmatpush2.msra.mxu0 0.0
    %775 = vmatprep.subr.mxu0 0.0
    %776 = vmatpush2.msra.mxu0 0.0
    %777 = vmatprep.subr.mxu0 0.0
    %778 = vmatpush2.msra.mxu0 0.0
    %779 = vmatprep.subr.mxu0 0.0
    %780 = vmatpush2.msra.mxu0 0.0
    %781 = vmatprep.subr.mxu0 0.0
    %782 = vmatpush2.msra.mxu0 0.0
    %783 = vmatprep.subr.mxu0 0.0
    %784 = vmatpush2.msra.mxu0 0.0
    %785 = vmatprep.subr.mxu0 0.0
    %786 = vmatpush2.msra.mxu0 0.0
    %787 = vmatprep.subr.mxu0 0.0
    %788 = vmatpush2.msra.mxu0 0.0
    %789 = vmatprep.subr.mxu0 0.0
    %790 = vmatpush2.msra.mxu0 0.0
    %791 = vmatprep.subr.mxu0 0.0
    %792 = vmatpush2.msra.mxu0 0.0
    %793 = vmatprep.subr.mxu0 0.0
    %794 = vmatpush2.msra.mxu0 0.0
    %795 = vmatprep.subr.mxu0 0.0
    %796 = vmatpush2.msra.mxu0 0.0
    %797 = vmatprep.mubr.f32.mxu0 0.0
    %798 = vmatmul.mubr.f32.gmra.mxu0 %v731
    %v799 = vpop.f32.mrf.mxu0
    %v800 = vadd.f32 0.0, %v799
    %v801 = vpop.f32.mrf.mxu0
    %802 = vdwg.mxu0
    %803 = vst.msk [vmem:[#allocation2 + $0x8] sm:$0xff] %vm285, %v800
    %804 = vrot.lane.b32.xlu0 %v181, 112
    %v805 = vpop.permute.xlu0 %804
    %806 = vrot.lane.b32.xlu0 %v277, 112
    %v807 = vpop.permute.xlu0 %806
    %808 = vrot.lane.b32.xlu0 %v282, 112
    %v809 = vpop.permute.xlu0 %808
    %v810 = vsel %vm285, %v805, 0
    %v812 = vsel %vm285, %v807, 0
    %v814 = vsel %vm285, %v809, 0
    %816 = vmatprep.subr.mxu0 0.0
    %817 = vmatpush1.xpose.msra.mxu0 0.0
    %818 = vmatprep.subr.mxu0 0.0
    %819 = vmatpush1.xpose.msra.mxu0 0.0
    %820 = vmatprep.subr.mxu0 0.0
    %821 = vmatpush1.xpose.msra.mxu0 0.0
    %822 = vmatprep.subr.mxu0 0.0
    %823 = vmatpush1.xpose.msra.mxu0 0.0
    %824 = vmatprep.subr.mxu0 0.0
    %825 = vmatpush1.xpose.msra.mxu0 0.0
    %826 = vmatprep.subr.mxu0 0.0
    %827 = vmatpush1.xpose.msra.mxu0 0.0
    %828 = vmatprep.subr.mxu0 0.0
    %829 = vmatpush1.xpose.msra.mxu0 0.0
    %830 = vmatprep.subr.mxu0 0.0
    %831 = vmatpush1.xpose.msra.mxu0 0.0
    %832 = vmatprep.subr.mxu0 0.0
    %833 = vmatpush1.xpose.msra.mxu0 0.0
    %834 = vmatprep.subr.mxu0 0.0
    %835 = vmatpush1.xpose.msra.mxu0 0.0
    %836 = vmatprep.subr.mxu0 0.0
    %837 = vmatpush1.xpose.msra.mxu0 0.0
    %838 = vmatprep.subr.mxu0 0.0
    %839 = vmatpush1.xpose.msra.mxu0 0.0
    %840 = vmatprep.subr.mxu0 0.0
    %841 = vmatpush1.xpose.msra.mxu0 0.0
    %842 = vmatprep.subr.mxu0 0.0
    %843 = vmatpush1.xpose.msra.mxu0 0.0
    %844 = vmatprep.subr.mxu0 0.0
    %845 = vmatpush1.xpose.msra.mxu0 %v814
    %846 = vmatprep.subr.mxu0 0.0
    %847 = vmatpush1.xpose.msra.mxu0 %v812
    %848 = vmatprep.subr.mxu0 0.0
    %849 = vmatpush2.xpose.msra.mxu0 0.0
    %850 = vmatprep.subr.mxu0 0.0
    %851 = vmatpush2.xpose.msra.mxu0 0.0
    %852 = vmatprep.subr.mxu0 0.0
    %853 = vmatpush2.xpose.msra.mxu0 0.0
    %854 = vmatprep.subr.mxu0 0.0
    %855 = vmatpush2.xpose.msra.mxu0 0.0
    %856 = vmatprep.subr.mxu0 0.0
    %857 = vmatpush2.xpose.msra.mxu0 0.0
    %858 = vmatprep.subr.mxu0 0.0
    %859 = vmatpush2.xpose.msra.mxu0 0.0
    %860 = vmatprep.subr.mxu0 0.0
    %861 = vmatpush2.xpose.msra.mxu0 0.0
    %862 = vmatprep.subr.mxu0 0.0
    %863 = vmatpush2.xpose.msra.mxu0 0.0
    %864 = vmatprep.subr.mxu0 0.0
    %865 = vmatpush2.xpose.msra.mxu0 0.0
    %866 = vmatprep.subr.mxu0 0.0
    %867 = vmatpush2.xpose.msra.mxu0 0.0
    %868 = vmatprep.subr.mxu0 0.0
    %869 = vmatpush2.xpose.msra.mxu0 0.0
    %870 = vmatprep.subr.mxu0 0.0
    %871 = vmatpush2.xpose.msra.mxu0 0.0
    %872 = vmatprep.subr.mxu0 0.0
    %873 = vmatpush2.xpose.msra.mxu0 0.0
    %874 = vmatprep.subr.mxu0 0.0
    %875 = vmatpush2.xpose.msra.mxu0 0.0
    %876 = vmatprep.subr.mxu0 0.0
    %877 = vmatpush2.xpose.msra.mxu0 0.0
    %878 = vmatprep.subr.mxu0 0.0
    %879 = vmatpush2.xpose.msra.mxu0 0.0
    %880 = vmatprep.mubr.f32.mxu0 0.0
    %881 = vmatmul.mubr.f32.gmra.mxu0 %v810
    %v882 = vpop.f32.mrf.mxu0
    %v883 = vadd.f32 0.0, %v882
    %v884 = vpop.f32.mrf.mxu0
    %885 = vdwg.mxu0
    %v886 = vsel %vm285, %v883, -inf
    %887 = vmax.xlane.f32.xlu0 %v886
    %v888 = vpop.xlane.xlu0 %887
    %v889 = vsub.f32 %v883, %v888
    %v890 = vmul.f32 %v889, 1.442695
    %v891 = vpow.pop %v890
    %v892 = vsel %vm285, %v891, 0.0
    %893 = vadd.xlane.f32.xlu0 %v892
    %v894 = vpop.xlane.xlu0 %893
    %v895 = vrcp.pop %v894
    %v896 = vmul.f32 %v891, %v895
    %897 = vrot.lane.b32.xlu0 %v277, 80
    %v898 = vpop.permute.xlu0 %897
    %899 = vrot.lane.b32.xlu0 %v282, 80
    %v900 = vpop.permute.xlu0 %899
    %v904 = vsel %vm285, %v896, 0
    %906 = vmatprep.subr.mxu0 0.0
    %907 = vmatpush1.msra.mxu0 0.0
    %908 = vmatprep.subr.mxu0 0.0
    %909 = vmatpush1.msra.mxu0 0.0
    %910 = vmatprep.subr.mxu0 0.0
    %911 = vmatpush1.msra.mxu0 0.0
    %912 = vmatprep.subr.mxu0 0.0
    %913 = vmatpush1.msra.mxu0 0.0
    %914 = vmatprep.subr.mxu0 0.0
    %915 = vmatpush1.msra.mxu0 0.0
    %916 = vmatprep.subr.mxu0 0.0
    %917 = vmatpush1.msra.mxu0 0.0
    %918 = vmatprep.subr.mxu0 0.0
    %919 = vmatpush1.msra.mxu0 0.0
    %920 = vmatprep.subr.mxu0 0.0
    %921 = vmatpush1.msra.mxu0 0.0
    %922 = vmatprep.subr.mxu0 0.0
    %923 = vmatpush1.msra.mxu0 0.0
    %924 = vmatprep.subr.mxu0 0.0
    %925 = vmatpush1.msra.mxu0 0.0
    %926 = vmatprep.subr.mxu0 0.0
    %927 = vmatpush1.msra.mxu0 0.0
    %928 = vmatprep.subr.mxu0 0.0
    %929 = vmatpush1.msra.mxu0 0.0
    %930 = vmatprep.subr.mxu0 0.0
    %931 = vmatpush1.msra.mxu0 0.0
    %932 = vmatprep.subr.mxu0 0.0
    %933 = vmatpush1.msra.mxu0 0.0
    %934 = vmatprep.subr.mxu0 0.0
    %935 = vmatpush1.msra.mxu0 %v900
    %936 = vmatprep.subr.mxu0 0.0
    %937 = vmatpush1.msra.mxu0 %v898
    %938 = vmatprep.subr.mxu0 0.0
    %939 = vmatpush2.msra.mxu0 0.0
    %940 = vmatprep.subr.mxu0 0.0
    %941 = vmatpush2.msra.mxu0 0.0
    %942 = vmatprep.subr.mxu0 0.0
    %943 = vmatpush2.msra.mxu0 0.0
    %944 = vmatprep.subr.mxu0 0.0
    %945 = vmatpush2.msra.mxu0 0.0
    %946 = vmatprep.subr.mxu0 0.0
    %947 = vmatpush2.msra.mxu0 0.0
    %948 = vmatprep.subr.mxu0 0.0
    %949 = vmatpush2.msra.mxu0 0.0
    %950 = vmatprep.subr.mxu0 0.0
    %951 = vmatpush2.msra.mxu0 0.0
    %952 = vmatprep.subr.mxu0 0.0
    %953 = vmatpush2.msra.mxu0 0.0
    %954 = vmatprep.subr.mxu0 0.0
    %955 = vmatpush2.msra.mxu0 0.0
    %956 = vmatprep.subr.mxu0 0.0
    %957 = vmatpush2.msra.mxu0 0.0
    %958 = vmatprep.subr.mxu0 0.0
    %959 = vmatpush2.msra.mxu0 0.0
    %960 = vmatprep.subr.mxu0 0.0
    %961 = vmatpush2.msra.mxu0 0.0
    %962 = vmatprep.subr.mxu0 0.0
    %963 = vmatpush2.msra.mxu0 0.0
    %964 = vmatprep.subr.mxu0 0.0
    %965 = vmatpush2.msra.mxu0 0.0
    %966 = vmatprep.subr.mxu0 0.0
    %967 = vmatpush2.msra.mxu0 0.0
    %968 = vmatprep.subr.mxu0 0.0
    %969 = vmatpush2.msra.mxu0 0.0
    %970 = vmatprep.mubr.f32.mxu0 0.0
    %971 = vmatmul.mubr.f32.gmra.mxu0 %v904
    %v972 = vpop.f32.mrf.mxu0
    %v973 = vadd.f32 0.0, %v972
    %v974 = vpop.f32.mrf.mxu0
    %975 = vdwg.mxu0
    %977 = vrot.lane.b32.xlu0 %v973, 16
    %v978 = vpop.permute.xlu0 %977
    %980 = vst.msk [vmem:[#allocation2 + $0x8] sm:$0xff] %vm632, %v978
    %v981 = vld [vmem:[#allocation2] sm:$0xff]
    %v982 = vld [vmem:[#allocation2 + $0x8] sm:$0xff]
    %v983 = vld [vmem:[#allocation11] sm:$0xff]
    %v984 = vld [vmem:[#allocation11 + $0x8] sm:$0xff]
    %v985 = vld [vmem:[#allocation11 + $0x10] sm:$0xff]
    %v986 = vld [vmem:[#allocation11 + $0x18] sm:$0xff]
    %v987 = vld [vmem:[%s5] sm:$0x1]
    %v989 = vlaneseq
    %v990 = vshrl.u32 %v989, 7
    %v991 = vsub.s32 0, %v990
    %v992 = vrot.slane %v987, %v991
    %v995 = vsel %vm102, %v981, 0
    %v998 = vsel %vm102, %v982, 0
    %1000 = vmatprep.subr.mxu0 0.0
    %1001 = vmatpush1.msra.mxu0 0.0
    %1002 = vmatprep.subr.mxu0 0.0
    %1003 = vmatpush1.msra.mxu0 0.0
    %1004 = vmatprep.subr.mxu0 0.0
    %1005 = vmatpush1.msra.mxu0 0.0
    %1006 = vmatprep.subr.mxu0 0.0
    %1007 = vmatpush1.msra.mxu0 0.0
    %1008 = vmatprep.subr.mxu0 0.0
    %1009 = vmatpush1.msra.mxu0 0.0
    %1010 = vmatprep.subr.mxu0 0.0
    %1011 = vmatpush1.msra.mxu0 0.0
    %1012 = vmatprep.subr.mxu0 0.0
    %1013 = vmatpush1.msra.mxu0 0.0
    %1014 = vmatprep.subr.mxu0 0.0
    %1015 = vmatpush1.msra.mxu0 0.0
    %1016 = vmatprep.subr.mxu0 0.0
    %1017 = vmatpush1.msra.mxu0 0.0
    %1018 = vmatprep.subr.mxu0 0.0
    %1019 = vmatpush1.msra.mxu0 0.0
    %1020 = vmatprep.subr.mxu0 0.0
    %1021 = vmatpush1.msra.mxu0 0.0
    %1022 = vmatprep.subr.mxu0 0.0
    %1023 = vmatpush1.msra.mxu0 0.0
    %1024 = vmatprep.subr.mxu0 0.0
    %1025 = vmatpush1.msra.mxu0 %v986
    %1026 = vmatprep.subr.mxu0 0.0
    %1027 = vmatpush1.msra.mxu0 %v985
    %1028 = vmatprep.subr.mxu0 0.0
    %1029 = vmatpush1.msra.mxu0 %v984
    %1030 = vmatprep.subr.mxu0 0.0
    %1031 = vmatpush1.msra.mxu0 %v983
    %1032 = vmatprep.subr.mxu0 0.0
    %1033 = vmatpush2.msra.mxu0 0.0
    %1034 = vmatprep.subr.mxu0 0.0
    %1035 = vmatpush2.msra.mxu0 0.0
    %1036 = vmatprep.subr.mxu0 0.0
    %1037 = vmatpush2.msra.mxu0 0.0
    %1038 = vmatprep.subr.mxu0 0.0
    %1039 = vmatpush2.msra.mxu0 0.0
    %1040 = vmatprep.subr.mxu0 0.0
    %1041 = vmatpush2.msra.mxu0 0.0
    %1042 = vmatprep.subr.mxu0 0.0
    %1043 = vmatpush2.msra.mxu0 0.0
    %1044 = vmatprep.subr.mxu0 0.0
    %1045 = vmatpush2.msra.mxu0 0.0
    %1046 = vmatprep.subr.mxu0 0.0
    %1047 = vmatpush2.msra.mxu0 0.0
    %1048 = vmatprep.subr.mxu0 0.0
    %1049 = vmatpush2.msra.mxu0 0.0
    %1050 = vmatprep.subr.mxu0 0.0
    %1051 = vmatpush2.msra.mxu0 0.0
    %1052 = vmatprep.subr.mxu0 0.0
    %1053 = vmatpush2.msra.mxu0 0.0
    %1054 = vmatprep.subr.mxu0 0.0
    %1055 = vmatpush2.msra.mxu0 0.0
    %1056 = vmatprep.subr.mxu0 0.0
    %1057 = vmatpush2.msra.mxu0 0.0
    %1058 = vmatprep.subr.mxu0 0.0
    %1059 = vmatpush2.msra.mxu0 0.0
    %1060 = vmatprep.subr.mxu0 0.0
    %1061 = vmatpush2.msra.mxu0 0.0
    %1062 = vmatprep.subr.mxu0 0.0
    %1063 = vmatpush2.msra.mxu0 0.0
    %1064 = vmatprep.mubr.f32.mxu0 0.0
    %1065 = vmatmul.mubr.f32.gmra.mxu0 %v995
    %v1066 = vpop.f32.mrf.mxu0
    %v1067 = vadd.f32 %v992, %v1066
    %v1068 = vpop.f32.mrf.mxu0
    %1069 = vmatprep.mubr.f32.mxu0 0.0
    %1070 = vmatmul.mubr.f32.gmra.mxu0 %v998
    %v1071 = vpop.f32.mrf.mxu0
    %v1072 = vadd.f32 %v992, %v1071
    %v1073 = vpop.f32.mrf.mxu0
    %1074 = vdwg.mxu0
    %1075 = vst [vmem:[#allocation12] sm:$0xff] %v1067
    %1076 = vst [vmem:[#allocation12 + $0x8] sm:$0xff] %v1072
    // Predicated region
    $region46: #{tpu_custom_call.1} parent=1 // pred_check
      _
    $region47: #{tpu_custom_call.1} parent=1 // pred_check_branch
      %1078 = sbr.rel (0) target = $region49
    $region48: #{tpu_custom_call.1} parent=1 // pred_region
      %s1080 = ssub.s32 256, 256
      %1081 = vsyncadd [#allocation5], %s1080
      %s1082 = sshll.u32 [#allocation12], 4
      %s1083 = int_to_ptr.vmem [resolvable:$true] %s1082
      %1088 = dma.vmem_to_hbm [thread:$0]  %s1083, 256, %s6, [#allocation5], 128, 128, 8
    $region49: #{tpu_custom_call.1} parent=1 // pred_fallthru
      _
    // Predicated region
    $region50: #{tpu_custom_call.1} parent=1 // pred_check
      _
    $region51: #{tpu_custom_call.1} parent=1 // pred_check_branch
      %1090 = sbr.rel (0) target = $region53
    $region52: #{tpu_custom_call.1} parent=1 // pred_region
      %1091 = dma.done [#allocation5], 256
    $region53: #{tpu_custom_call.1} parent=1 // pred_fallthru
      _
    %1092 = vsyncpa [#allocation4], 1
    %1093 = vsyncpa [#allocation7], 1
    %1094 = vsyncpa [#allocation10], 1
    %1095 = vsyncpa [#allocation5], 1

</llo_original>
